<compile_context>
chip_gen: v6e
topology: v6e:2x2x1
jax: 0.10.0
libtpu: 0.0.40
codegen_flags: <defaults>
</compile_context>

<pallas_src>
import functools

import jax
import jax.numpy as jnp
from jax.experimental import pallas as pl
from jax.experimental.pallas import tpu as pltpu

_LANES = 128
_MAX_TILE_SUBLANES = 2048  # (2048, 128) f32 tile = 1 MiB per input


def _recon_pred_loss_kernel(et_ref, rt_ref, at_ref, ef_ref, rf_ref, af_ref,
                            out_ref, *, beta):
    """Per-tile partial sum of (1 + (1+a)^beta) * (edge - recon)^2 over both halves."""
    d_to = et_ref[...] - rt_ref[...]          # (TILE_M, 128)
    d_fr = ef_ref[...] - rf_ref[...]

    if beta == 1.0:
        # (1+a)^1 + 1 == 2 + a : no transcendentals.
        w_to = 2.0 + at_ref[...]
        w_fr = 2.0 + af_ref[...]
    else:
        # (1+a)^beta = exp(beta * log(1+a)); one exp + one log per element (EUP).
        w_to = 1.0 + jnp.exp(beta * jnp.log(1.0 + at_ref[...]))
        w_fr = 1.0 + jnp.exp(beta * jnp.log(1.0 + af_ref[...]))

    contrib = w_to * (d_to * d_to) + w_fr * (d_fr * d_fr)   # (TILE_M, 128)
    # Lane-dense partial sums: reduce only the sublane axis (XLU), keep 128 lanes.
    out_ref[...] = jnp.sum(contrib, axis=0, keepdims=True)  # (1, 128)


def reconstruction_pred_loss(edge_to, edge_from, recon_to, recon_from,
                             a_to, a_from, *, beta=1.0, alpha=0.5):
    """JAX wrapper reproducing ReconstructionPredLoss.forward (alpha is unused there)."""
    del alpha  # stored but never used in the PyTorch forward
    edge_to = jnp.asarray(edge_to, jnp.float32)
    edge_from = jnp.asarray(edge_from, jnp.float32)
    recon_to = jnp.asarray(recon_to, jnp.float32)
    recon_from = jnp.asarray(recon_from, jnp.float32)
    a_to = jnp.broadcast_to(jnp.asarray(a_to, jnp.float32), edge_to.shape)
    a_from = jnp.broadcast_to(jnp.asarray(a_from, jnp.float32), edge_from.shape)

    n_elems = edge_to.size                                   # B * D (per half)
    m = pl.cdiv(n_elems, _LANES)                             # sublanes needed
    tile_m = min(_MAX_TILE_SUBLANES, ((m + 7) // 8) * 8)     # (8,128)-aligned tile
    m_pad = ((m + tile_m - 1) // tile_m) * tile_m            # pad to whole tiles
    num_tiles = m_pad // tile_m

    def _prep(x):
        # Flatten and zero-pad to a lane-dense (m_pad, 128) slab. Padding is exact:
        # padded edge/recon are both 0 -> diff 0 -> contribution 0 for any weight.
        flat = x.reshape(-1)
        flat = jnp.pad(flat, (0, m_pad * _LANES - flat.shape[0]))
        return flat.reshape(m_pad, _LANES)

    inputs = [_prep(x) for x in
              (edge_to, recon_to, a_to, edge_from, recon_from, a_from)]

    kernel = functools.partial(_recon_pred_loss_kernel, beta=float(beta))

    n_total = m_pad * _LANES
    cost = pl.CostEstimate(
        flops=8 * n_total,
        transcendentals=(0 if float(beta) == 1.0 else 4 * n_total),
        bytes_accessed=(6 * n_total + num_tiles * _LANES) * 4,
    )

    in_spec = pl.BlockSpec((tile_m, _LANES), lambda i: (i, 0))
    partials = pl.pallas_call(
        kernel,
        out_shape=jax.ShapeDtypeStruct((num_tiles, _LANES), jnp.float32),
        grid_spec=pltpu.PrefetchScalarGridSpec(
            num_scalar_prefetch=0,
            grid=(num_tiles,),
            in_specs=[in_spec] * 6,
            out_specs=pl.BlockSpec((1, _LANES), lambda i: (i, 0)),
        ),
        compiler_params=pltpu.CompilerParams(
            dimension_semantics=("parallel",)),
        cost_estimate=cost,
    )(*inputs)

    total_sum = jnp.sum(partials)                 # tiny final reduce in JAX
    return total_sum / jnp.float32(2 * n_elems)   # == point_loss + (loss1+loss2)/2


def _reference_loss(edge_to, edge_from, recon_to, recon_from, a_to, a_from,
                    *, beta=1.0):
    """Pure-JAX transcription of the PyTorch forward, for correctness checking."""
    loss1 = jnp.mean(jnp.mean(
        jnp.power(1.0 + a_to, beta) * jnp.square(edge_to - recon_to), axis=1))
    loss2 = jnp.mean(jnp.mean(
        jnp.power(1.0 + a_from, beta) * jnp.square(edge_from - recon_from), axis=1))
    combined_edge = jnp.concatenate([edge_from, edge_to], axis=0)
    combined_recon = jnp.concatenate([recon_from, recon_to], axis=0)
    point_loss = jnp.mean(jnp.square(combined_edge - combined_recon))
    return point_loss + (loss1 + loss2) / 2.0


if __name__ == "__main__":
    key = jax.random.PRNGKey(0)
    k_et, k_ef, k_rt, k_rf, k_at, k_af = jax.random.split(key, 6)

    B, D = 8, 32   # small batch of D-dim samples + reconstructions + attentions
    edge_to = jax.random.normal(k_et, (B, D), dtype=jnp.float32)
    edge_from = jax.random.normal(k_ef, (B, D), dtype=jnp.float32)
    recon_to = jax.random.normal(k_rt, (B, D), dtype=jnp.float32)
    recon_from = jax.random.normal(k_rf, (B, D), dtype=jnp.float32)
    a_to = jax.random.uniform(k_at, (B, D), dtype=jnp.float32)
    a_from = jax.random.uniform(k_af, (B, D), dtype=jnp.float32)

    ok = True
    for beta in (1.0, 2.0):   # exercise both the fast path and the general-beta path
        loss = reconstruction_pred_loss(edge_to, edge_from, recon_to, recon_from,
                                        a_to, a_from, beta=beta)
        loss = jax.block_until_ready(loss)
        ref = jax.block_until_ready(
            _reference_loss(edge_to, edge_from, recon_to, recon_from,
                            a_to, a_from, beta=beta))
        if not jnp.allclose(loss, ref, rtol=1e-5, atol=1e-5):
            ok = False
            print("MISMATCH beta=", beta, float(loss), float(ref))

    assert ok
    print("KERNEL_OK")
</pallas_src>

<mosaic_0001>
module attributes {stable_mosaic.version = 11 : i64} {
  func.func @_recon_pred_loss_kernel(%arg0: i32, %arg1: memref<8x128xf32, #tpu.memory_space<vmem>>, %arg2: memref<8x128xf32, #tpu.memory_space<vmem>>, %arg3: memref<8x128xf32, #tpu.memory_space<vmem>>, %arg4: memref<8x128xf32, #tpu.memory_space<vmem>>, %arg5: memref<8x128xf32, #tpu.memory_space<vmem>>, %arg6: memref<8x128xf32, #tpu.memory_space<vmem>>, %arg7: memref<1x128xf32, #tpu.memory_space<vmem>>) attributes {dimension_semantics = [#tpu.dimension_semantics<parallel>], iteration_bounds = array<i64: 1>, scalar_prefetch = 0 : i64, scratch_operands = 0 : i64, tpu.core_type = #tpu.core_type<tc>, window_params = [{transform_indices = @transform_0, window_bounds = array<i64: 8, 128>}, {transform_indices = @transform_1, window_bounds = array<i64: 8, 128>}, {transform_indices = @transform_2, window_bounds = array<i64: 8, 128>}, {transform_indices = @transform_3, window_bounds = array<i64: 8, 128>}, {transform_indices = @transform_4, window_bounds = array<i64: 8, 128>}, {transform_indices = @transform_5, window_bounds = array<i64: 8, 128>}, {transform_indices = @transform_6, window_bounds = array<i64: 1, 128>}]} {
    %c0 = arith.constant 0 : index
    %c0_0 = arith.constant 0 : index
    %0 = vector.load %arg1[%c0, %c0_0] : memref<8x128xf32, #tpu.memory_space<vmem>>, vector<8x128xf32>
    %c0_1 = arith.constant 0 : index
    %c0_2 = arith.constant 0 : index
    %1 = vector.load %arg2[%c0_1, %c0_2] : memref<8x128xf32, #tpu.memory_space<vmem>>, vector<8x128xf32>
    %2 = arith.subf %0, %1 : vector<8x128xf32>
    %c0_3 = arith.constant 0 : index
    %c0_4 = arith.constant 0 : index
    %3 = vector.load %arg4[%c0_3, %c0_4] : memref<8x128xf32, #tpu.memory_space<vmem>>, vector<8x128xf32>
    %c0_5 = arith.constant 0 : index
    %c0_6 = arith.constant 0 : index
    %4 = vector.load %arg5[%c0_5, %c0_6] : memref<8x128xf32, #tpu.memory_space<vmem>>, vector<8x128xf32>
    %5 = arith.subf %3, %4 : vector<8x128xf32>
    %c0_7 = arith.constant 0 : index
    %c0_8 = arith.constant 0 : index
    %6 = vector.load %arg3[%c0_7, %c0_8] : memref<8x128xf32, #tpu.memory_space<vmem>>, vector<8x128xf32>
    %cst = arith.constant 2.000000e+00 : f32
    %7 = vector.broadcast %cst : f32 to vector<8x128xf32>
    %8 = arith.addf %7, %6 : vector<8x128xf32>
    %c0_9 = arith.constant 0 : index
    %c0_10 = arith.constant 0 : index
    %9 = vector.load %arg6[%c0_9, %c0_10] : memref<8x128xf32, #tpu.memory_space<vmem>>, vector<8x128xf32>
    %cst_11 = arith.constant 2.000000e+00 : f32
    %10 = vector.broadcast %cst_11 : f32 to vector<8x128xf32>
    %11 = arith.addf %10, %9 : vector<8x128xf32>
    %12 = arith.mulf %2, %2 : vector<8x128xf32>
    %13 = arith.mulf %8, %12 : vector<8x128xf32>
    %14 = arith.mulf %5, %5 : vector<8x128xf32>
    %15 = arith.mulf %11, %14 : vector<8x128xf32>
    %16 = arith.addf %13, %15 : vector<8x128xf32>
    %cst_12 = arith.constant dense<0.000000e+00> : vector<128xf32>
    %17 = vector.multi_reduction <add>, %16, %cst_12 [0] : vector<8x128xf32> to vector<128xf32>
    %18 = vector.shape_cast %17 : vector<128xf32> to vector<1x128xf32>
    %c0_13 = arith.constant 0 : index
    %c0_14 = arith.constant 0 : index
    %19 = vector.load %arg7[%c0_13, %c0_14] : memref<1x128xf32, #tpu.memory_space<vmem>>, vector<1x128xf32>
    tpu.vector_store %arg7[%c0_13, %c0_14], %18 {strides = array<i32>} : memref<1x128xf32, #tpu.memory_space<vmem>>, vector<1x128xf32>,
    return
  }
  func.func @transform_0(%arg0: i32) -> (i32, i32) {
    %c0_i32 = arith.constant 0 : i32
    %c0_i32_0 = arith.constant 0 : i32
    return %arg0, %c0_i32 : i32, i32
  }
  func.func @transform_1(%arg0: i32) -> (i32, i32) {
    %c0_i32 = arith.constant 0 : i32
    %c0_i32_0 = arith.constant 0 : i32
    return %arg0, %c0_i32 : i32, i32
  }
  func.func @transform_2(%arg0: i32) -> (i32, i32) {
    %c0_i32 = arith.constant 0 : i32
    %c0_i32_0 = arith.constant 0 : i32
    return %arg0, %c0_i32 : i32, i32
  }
  func.func @transform_3(%arg0: i32) -> (i32, i32) {
    %c0_i32 = arith.constant 0 : i32
    %c0_i32_0 = arith.constant 0 : i32
    return %arg0, %c0_i32 : i32, i32
  }
  func.func @transform_4(%arg0: i32) -> (i32, i32) {
    %c0_i32 = arith.constant 0 : i32
    %c0_i32_0 = arith.constant 0 : i32
    return %arg0, %c0_i32 : i32, i32
  }
  func.func @transform_5(%arg0: i32) -> (i32, i32) {
    %c0_i32 = arith.constant 0 : i32
    %c0_i32_0 = arith.constant 0 : i32
    return %arg0, %c0_i32 : i32, i32
  }
  func.func @transform_6(%arg0: i32) -> (i32, i32) {
    %c0_i32 = arith.constant 0 : i32
    %c0_i32_0 = arith.constant 0 : i32
    return %arg0, %c0_i32 : i32, i32
  }
}

</mosaic_0001>

<llo_original>
// kernel: tpu_custom_call.1
$region0: #{tpu_custom_call.1}
  #allocation0 [shape = 'u32[]', space=smem, size = 0x4, offset = 0x4, fixed_abs, tag = 'smem constant byte address 0x4 - core index']
  #allocation1 [shape = 'u32[144,128]{1,0:T(1,128)}', space=vmem, size = 0x12000, scoped, tag = 'internal scratch']
  %s0 = inlined_call_operand.hbm [shape: f32[8,128], index: 0, kind: input, shape index: {}]
  %s1 = inlined_call_operand.hbm [shape: f32[8,128], index: 1, kind: input, shape index: {}]
  %s2 = inlined_call_operand.hbm [shape: f32[8,128], index: 2, kind: input, shape index: {}]
  %s3 = inlined_call_operand.hbm [shape: f32[8,128], index: 3, kind: input, shape index: {}]
  %s4 = inlined_call_operand.hbm [shape: f32[8,128], index: 4, kind: input, shape index: {}]
  %s5 = inlined_call_operand.vmem [shape: f32[8,128], index: 5, kind: input, shape index: {}]
  %s6 = inlined_call_operand.hbm [shape: f32[1,128], index: 6, kind: output, shape index: {}]
  %s7 = sld [smem:[#allocation0]]
  $region54: #{tpu_custom_call.1} parent=0
    _
  %s9 = ssub.s32 1, %s7
  %s10 = scalar_select 0, %s9, %s7
  $region1: #{tpu_custom_call.1} parent=0
    #allocation2 [shape = 'u8[4096]{0}', space=vmem, size = 0x1000, scoped, tag = 'input window, operand 0, single buffered']
    #allocation3 [shape = 's32[1]{0}', space=sflag, size = 0x4, scoped, tag = 'scoped memory for tpu_custom_call.1']
    #allocation4 [shape = 's32[1]{0}', space=sflag, size = 0x4, scoped, tag = 'scoped memory for tpu_custom_call.1']
    #allocation5 [shape = 'u8[4096]{0}', space=vmem, size = 0x1000, scoped, tag = 'input window, operand 1, single buffered']
    #allocation6 [shape = 's32[1]{0}', space=sflag, size = 0x4, scoped, tag = 'scoped memory for tpu_custom_call.1']
    #allocation7 [shape = 'u8[4096]{0}', space=vmem, size = 0x1000, scoped, tag = 'input window, operand 2, single buffered']
    #allocation8 [shape = 'u8[4096]{0}', space=vmem, size = 0x1000, scoped, tag = 'input window, operand 3, single buffered']
    #allocation9 [shape = 's32[1]{0}', space=sflag, size = 0x4, scoped, tag = 'scoped memory for tpu_custom_call.1']
    #allocation10 [shape = 'u8[4096]{0}', space=vmem, size = 0x1000, scoped, tag = 'input window, operand 4, single buffered']
    #allocation11 [shape = 'u8[512]{0}', space=vmem, size = 0x400, scoped, tag = 'output window, operand 0, single buffered']
    %11 = vsyncpa [#allocation3], 0
    %12 = vsyncpa [#allocation6], 0
    %13 = vsyncpa [#allocation9], 0
    %14 = vsyncpa [#allocation4], 0
    // Predicated region
    $region2: #{tpu_custom_call.1} parent=1 // pred_check
      _
    $region3: #{tpu_custom_call.1} parent=1 // pred_check_branch
      %16 = sbr.rel (0) target = $region5
    $region4: #{tpu_custom_call.1} parent=1 // pred_region
      %s18 = ssub.s32 128, 128
      %19 = vsyncadd [#allocation3], %s18
      %s21 = sshll.u32 [#allocation2], 4
      %s22 = int_to_ptr.vmem [resolvable:$true] %s21
      %24 = dma.hbm_to_vmem [thread:$0]  %s0, 128, %s22, [#allocation3]
    $region5: #{tpu_custom_call.1} parent=1 // pred_fallthru
      _
    // Predicated region
    $region6: #{tpu_custom_call.1} parent=1 // pred_check
      _
    $region7: #{tpu_custom_call.1} parent=1 // pred_check_branch
      %26 = sbr.rel (0) target = $region9
    $region8: #{tpu_custom_call.1} parent=1 // pred_region
      %s28 = ssub.s32 128, 128
      %29 = vsyncadd [#allocation6], %s28
      %s31 = sshll.u32 [#allocation5], 4
      %s32 = int_to_ptr.vmem [resolvable:$true] %s31
      %34 = dma.hbm_to_vmem [thread:$0]  %s1, 128, %s32, [#allocation6]
    $region9: #{tpu_custom_call.1} parent=1 // pred_fallthru
      _
    // Predicated region
    $region10: #{tpu_custom_call.1} parent=1 // pred_check
      _
    $region11: #{tpu_custom_call.1} parent=1 // pred_check_branch
      %36 = sbr.rel (0) target = $region13
    $region12: #{tpu_custom_call.1} parent=1 // pred_region
      %s38 = ssub.s32 128, 128
      %39 = vsyncadd [#allocation6], %s38
      %s41 = sshll.u32 [#allocation7], 4
      %s42 = int_to_ptr.vmem [resolvable:$true] %s41
      %44 = dma.hbm_to_vmem [thread:$0]  %s2, 128, %s42, [#allocation6]
    $region13: #{tpu_custom_call.1} parent=1 // pred_fallthru
      _
    // Predicated region
    $region14: #{tpu_custom_call.1} parent=1 // pred_check
      _
    $region15: #{tpu_custom_call.1} parent=1 // pred_check_branch
      %46 = sbr.rel (0) target = $region17
    $region16: #{tpu_custom_call.1} parent=1 // pred_region
      %s48 = ssub.s32 128, 128
      %49 = vsyncadd [#allocation9], %s48
      %s51 = sshll.u32 [#allocation8], 4
      %s52 = int_to_ptr.vmem [resolvable:$true] %s51
      %54 = dma.hbm_to_vmem [thread:$0]  %s3, 128, %s52, [#allocation9]
    $region17: #{tpu_custom_call.1} parent=1 // pred_fallthru
      _
    // Predicated region
    $region18: #{tpu_custom_call.1} parent=1 // pred_check
      _
    $region19: #{tpu_custom_call.1} parent=1 // pred_check_branch
      %56 = sbr.rel (0) target = $region21
    $region20: #{tpu_custom_call.1} parent=1 // pred_region
      %s58 = ssub.s32 128, 128
      %59 = vsyncadd [#allocation9], %s58
      %s61 = sshll.u32 [#allocation10], 4
      %s62 = int_to_ptr.vmem [resolvable:$true] %s61
      %64 = dma.hbm_to_vmem [thread:$0]  %s4, 128, %s62, [#allocation9]
    $region21: #{tpu_custom_call.1} parent=1 // pred_fallthru
      _
    // Predicated region
    $region22: #{tpu_custom_call.1} parent=1 // pred_check
      _
    $region23: #{tpu_custom_call.1} parent=1 // pred_check_branch
      %66 = sbr.rel (0) target = $region25
    $region24: #{tpu_custom_call.1} parent=1 // pred_region
      _
    $region25: #{tpu_custom_call.1} parent=1 // pred_fallthru
      _
    // Predicated region
    $region26: #{tpu_custom_call.1} parent=1 // pred_check
      _
    $region27: #{tpu_custom_call.1} parent=1 // pred_check_branch
      %68 = sbr.rel (0) target = $region29
    $region28: #{tpu_custom_call.1} parent=1 // pred_region
      %69 = dma.done [#allocation3], 128
    $region29: #{tpu_custom_call.1} parent=1 // pred_fallthru
      _
    // Predicated region
    $region30: #{tpu_custom_call.1} parent=1 // pred_check
      _
    $region31: #{tpu_custom_call.1} parent=1 // pred_check_branch
      %71 = sbr.rel (0) target = $region33
    $region32: #{tpu_custom_call.1} parent=1 // pred_region
      %72 = dma.done [#allocation6], 128
    $region33: #{tpu_custom_call.1} parent=1 // pred_fallthru
      _
    // Predicated region
    $region34: #{tpu_custom_call.1} parent=1 // pred_check
      _
    $region35: #{tpu_custom_call.1} parent=1 // pred_check_branch
      %74 = sbr.rel (0) target = $region37
    $region36: #{tpu_custom_call.1} parent=1 // pred_region
      %75 = dma.done [#allocation6], 128
    $region37: #{tpu_custom_call.1} parent=1 // pred_fallthru
      _
    // Predicated region
    $region38: #{tpu_custom_call.1} parent=1 // pred_check
      _
    $region39: #{tpu_custom_call.1} parent=1 // pred_check_branch
      %77 = sbr.rel (0) target = $region41
    $region40: #{tpu_custom_call.1} parent=1 // pred_region
      %78 = dma.done [#allocation9], 128
    $region41: #{tpu_custom_call.1} parent=1 // pred_fallthru
      _
    // Predicated region
    $region42: #{tpu_custom_call.1} parent=1 // pred_check
      _
    $region43: #{tpu_custom_call.1} parent=1 // pred_check_branch
      %80 = sbr.rel (0) target = $region45
    $region44: #{tpu_custom_call.1} parent=1 // pred_region
      %81 = dma.done [#allocation9], 128
    $region45: #{tpu_custom_call.1} parent=1 // pred_fallthru
      _
    %v82 = vld [vmem:[#allocation2] sm:$0xff]
    %v83 = vld [vmem:[#allocation5] sm:$0xff]
    %v84 = vsub.f32 %v82, %v83
    %v85 = vld [vmem:[#allocation8] sm:$0xff]
    %v86 = vld [vmem:[#allocation10] sm:$0xff]
    %v87 = vsub.f32 %v85, %v86
    %v88 = vld [vmem:[#allocation7] sm:$0xff]
    %v89 = vadd.f32 %v88, 2.0
    %v90 = vld [vmem:[%s5] sm:$0xff]
    %v91 = vadd.f32 %v90, 2.0
    %v92 = vmul.f32 %v84, %v84
    %v93 = vmul.f32 %v89, %v92
    %v94 = vmul.f32 %v87, %v87
    %v95 = vmul.f32 %v91, %v94
    %v96 = vadd.f32 %v93, %v95
    %v97 = vrot.slane %v96, 4
    %v98 = vadd.f32 %v96, %v97
    %v99 = vrot.slane %v98, 2
    %v100 = vadd.f32 %v98, %v99
    %v101 = vrot.slane %v100, 1
    %v102 = vadd.f32 %v100, %v101
    %103 = vst [vmem:[#allocation11] sm:$0x1] %v102
    // Predicated region
    $region46: #{tpu_custom_call.1} parent=1 // pred_check
      _
    $region47: #{tpu_custom_call.1} parent=1 // pred_check_branch
      %105 = sbr.rel (0) target = $region49
    $region48: #{tpu_custom_call.1} parent=1 // pred_region
      %s107 = ssub.s32 16, 16
      %108 = vsyncadd [#allocation4], %s107
      %s110 = sshll.u32 [#allocation11], 4
      %s111 = int_to_ptr.vmem [resolvable:$true] %s110
      %113 = dma.vmem_to_hbm [thread:$0]  %s111, 16, %s6, [#allocation4]
    $region49: #{tpu_custom_call.1} parent=1 // pred_fallthru
      _
    // Predicated region
    $region50: #{tpu_custom_call.1} parent=1 // pred_check
      _
    $region51: #{tpu_custom_call.1} parent=1 // pred_check_branch
      %115 = sbr.rel (0) target = $region53
    $region52: #{tpu_custom_call.1} parent=1 // pred_region
      %116 = dma.done [#allocation4], 16
    $region53: #{tpu_custom_call.1} parent=1 // pred_fallthru
      _
    %117 = vsyncpa [#allocation3], 1
    %118 = vsyncpa [#allocation6], 1
    %119 = vsyncpa [#allocation9], 1
    %120 = vsyncpa [#allocation4], 1

</llo_original>
